<compile_context>
chip_gen: v7x
topology: tpu7x:2x2x1
jax: 0.10.0
libtpu: 0.0.40
codegen_flags: <defaults>
</compile_context>

<pallas_src>
import math
import functools

import jax
import jax.numpy as jnp
from jax import lax
from jax.experimental import pallas as pl
from jax.experimental.pallas import tpu as pltpu


MATMUL_DTYPE = jnp.bfloat16            # MXU inputs; accumulation stays f32
VMEM_LIMIT = 48 * 1024 * 1024          # safe on v7x (64 MiB phys); plenty of headroom


def _mm(a, w):
    return jnp.dot(a.astype(MATMUL_DTYPE), w.astype(MATMUL_DTYPE),
                   preferred_element_type=jnp.float32)


def _apply_act(y, activation):
    if activation == "gelu":
        # TODO(synk): nn.GELU default is exact erf; tanh approximation used here.
        c = math.sqrt(2.0 / math.pi)
        return 0.5 * y * (1.0 + jnp.tanh(c * (y + 0.044715 * (y ** 3))))
    if activation == "relu":
        return jnp.maximum(y, 0.0)
    return y


# ----------------------------- row-tiled linear -----------------------------

def _linear_kernel(*refs, activation, has_add):
    if has_add:
        x_ref, w_ref, b_ref, a_ref, o_ref = refs
    else:
        x_ref, w_ref, b_ref, o_ref = refs
        a_ref = None
    y = _mm(x_ref[...], w_ref[...]) + b_ref[...]
    y = _apply_act(y, activation)
    if a_ref is not None:
        y = y + a_ref[...]
    o_ref[...] = y.astype(o_ref.dtype)


def linear(x2d, w, b, *, add=None, activation="none", row_tile=512):
    """x2d: (M, K) @ w: (K, N) + b, optional fused elementwise add of `add` (M, N)."""
    M, K = x2d.shape
    K2, N = w.shape
    assert K == K2
    tm = M if M <= row_tile else row_tile
    grid = (pl.cdiv(M, tm),)
    in_specs = [
        pl.BlockSpec((tm, K), lambda i: (i, 0)),
        pl.BlockSpec((K, N), lambda i: (0, 0)),    # weight stays VMEM-resident
        pl.BlockSpec((1, N), lambda i: (0, 0)),
    ]
    args = [x2d, w, b.reshape(1, N)]
    if add is not None:
        in_specs.append(pl.BlockSpec((tm, N), lambda i: (i, 0)))
        args.append(add)
    return pl.pallas_call(
        functools.partial(_linear_kernel, activation=activation,
                          has_add=add is not None),
        out_shape=jax.ShapeDtypeStruct((M, N), jnp.float32),
        grid=grid,
        in_specs=in_specs,
        out_specs=pl.BlockSpec((tm, N), lambda i: (i, 0)),
        compiler_params=pltpu.CompilerParams(
            dimension_semantics=("parallel",),
            vmem_limit_bytes=VMEM_LIMIT),
    )(*args)


# ------------------- fused transformer STACK (all layers in one call) -------------------

def _fused_stack_kernel(*refs, num_layers, num_heads, seq, pre_norm, activation,
                        eps, has_final_ln, final_eps):
    if has_final_ln:
        (x_ref, ln1g, ln1b, wq, wk, wv, bq, bk, bv, wo, bo,
         ln2g, ln2b, w1, b1, w2, b2, fng, fnb, o_ref) = refs
    else:
        (x_ref, ln1g, ln1b, wq, wk, wv, bq, bk, bv, wo, bo,
         ln2g, ln2b, w1, b1, w2, b2, o_ref) = refs
        fng = fnb = None

    layer = pl.program_id(1)

    # Layer 0: seed the VMEM-resident output block (the layer-to-layer carry).
    @pl.when(layer == 0)
    def _():
        o_ref[...] = x_ref[...]

    x = o_ref[0].astype(jnp.float32)                      # (M, E)
    M, E = x.shape
    H = num_heads
    Dh = E // H
    scale = Dh ** -0.5

    # Block-diagonal mask: rows are ordered (group, seq); attention only mixes
    # rows of the same group (decoder: same patch, attention over the batch axis).
    groups = M // seq
    if groups > 1:
        ri = lax.broadcasted_iota(jnp.int32, (M, M), 0) // seq
        ci = lax.broadcasted_iota(jnp.int32, (M, M), 1) // seq
        same_group = ri == ci

    def ln(v, g, b, e):
        mu = jnp.mean(v, axis=-1, keepdims=True)
        vc = v - mu
        var = jnp.mean(vc * vc, axis=-1, keepdims=True)
        return vc * lax.rsqrt(var + e) * g + b

    def mhsa(h):
        hb = h.astype(MATMUL_DTYPE)
        parts = []
        for hh in range(H):
            q = (jnp.dot(hb, wq[0, hh], preferred_element_type=jnp.float32)
                 + bq[0, hh]) * scale                                   # (M, Dh)
            k = jnp.dot(hb, wk[0, hh], preferred_element_type=jnp.float32) + bk[0, hh]
            v = jnp.dot(hb, wv[0, hh], preferred_element_type=jnp.float32) + bv[0, hh]
            s = lax.dot_general(q.astype(MATMUL_DTYPE), k.astype(MATMUL_DTYPE),
                                (((1,), (1,)), ((), ())),
                                preferred_element_type=jnp.float32)      # (M, M)
            if groups > 1:
                s = jnp.where(same_group, s, -1e30)
            s = s - jnp.max(s, axis=-1, keepdims=True)
            p = jnp.exp(s)
            p = p * pl.reciprocal(jnp.sum(p, axis=-1, keepdims=True), approx=True)
            parts.append(jnp.dot(p.astype(MATMUL_DTYPE), v.astype(MATMUL_DTYPE),
                                 preferred_element_type=jnp.float32))    # (M, Dh)
        ctx = jnp.concatenate(parts, axis=-1)                            # (M, E)
        # Single out-projection with full K=E contraction depth.
        return jnp.dot(ctx.astype(MATMUL_DTYPE), wo[0],
                       preferred_element_type=jnp.float32) + bo[0]

    def mlp(h):
        m = jnp.dot(h.astype(MATMUL_DTYPE), w1[0],
                    preferred_element_type=jnp.float32) + b1[0]
        m = _apply_act(m, activation)
        return jnp.dot(m.astype(MATMUL_DTYPE), w2[0],
                       preferred_element_type=jnp.float32) + b2[0]

    if pre_norm:
        # timm ViT block: x = x + attn(LN1(x)); x = x + mlp(LN2(x))
        x = x + mhsa(ln(x, ln1g[0], ln1b[0], eps))
        out = x + mlp(ln(x, ln2g[0], ln2b[0], eps))
    else:
        # nn.TransformerEncoderLayer (post-norm, ReLU): LN1(x+attn(x)); LN2(x+mlp(x))
        x = ln(x + mhsa(x), ln1g[0], ln1b[0], eps)
        out = ln(x + mlp(x), ln2g[0], ln2b[0], eps)

    if has_final_ln:
        # Final encoder LayerNorm fused into the last layer's epilogue.
        @pl.when(layer == num_layers - 1)
        def _():
            o_ref[0] = ln(out, fng[...], fnb[...], final_eps).astype(o_ref.dtype)

        @pl.when(layer < num_layers - 1)
        def _():
            o_ref[0] = out.astype(o_ref.dtype)
    else:
        o_ref[0] = out.astype(o_ref.dtype)


def fused_transformer_stack(x, stack, *, seq, num_heads, pre_norm, activation, eps,
                            final_ln=None, final_eps=1e-6):
    """x: (R, M, E).  Attention mixes rows of the same `seq`-sized group within a
    block; dense matmuls run on all M rows of the block.  All layers of `stack`
    are executed inside one pallas_call (layer axis = inner grid axis)."""
    R, M, E = x.shape
    L = stack["wq"].shape[0]
    H = num_heads
    Dh = E // H
    F = stack["w1"].shape[-1]

    xmap = lambda r, l: (r, 0, 0)          # activation block: constant over layers
    w3 = lambda r, l: (l, 0, 0)            # per-layer stacked weights
    w4 = lambda r, l: (l, 0, 0, 0)
    c2 = lambda r, l: (0, 0)               # final-LN params (constant)

    in_specs = [
        pl.BlockSpec((1, M, E), xmap),
        pl.BlockSpec((1, 1, E), w3), pl.BlockSpec((1, 1, E), w3),          # ln1 g/b
        pl.BlockSpec((1, H, E, Dh), w4), pl.BlockSpec((1, H, E, Dh), w4),  # wq, wk
        pl.BlockSpec((1, H, E, Dh), w4),                                   # wv
        pl.BlockSpec((1, H, 1, Dh), w4), pl.BlockSpec((1, H, 1, Dh), w4),  # bq, bk
        pl.BlockSpec((1, H, 1, Dh), w4),                                   # bv
        pl.BlockSpec((1, E, E), w3), pl.BlockSpec((1, 1, E), w3),          # wo, bo
        pl.BlockSpec((1, 1, E), w3), pl.BlockSpec((1, 1, E), w3),          # ln2 g/b
        pl.BlockSpec((1, E, F), w3), pl.BlockSpec((1, 1, F), w3),          # w1, b1
        pl.BlockSpec((1, F, E), w3), pl.BlockSpec((1, 1, E), w3),          # w2, b2
    ]
    args = [x, stack["ln1_g"], stack["ln1_b"],
            stack["wq"], stack["wk"], stack["wv"],
            stack["bq"], stack["bk"], stack["bv"],
            stack["wo"], stack["bo"],
            stack["ln2_g"], stack["ln2_b"],
            stack["w1"], stack["b1"], stack["w2"], stack["b2"]]
    has_final_ln = final_ln is not None
    if has_final_ln:
        fg, fb = final_ln
        in_specs += [pl.BlockSpec((1, E), c2), pl.BlockSpec((1, E), c2)]
        args += [fg.reshape(1, E), fb.reshape(1, E)]

    return pl.pallas_call(
        functools.partial(
            _fused_stack_kernel, num_layers=L, num_heads=H, seq=seq,
            pre_norm=pre_norm, activation=activation, eps=eps,
            has_final_ln=has_final_ln, final_eps=final_eps),
        out_shape=jax.ShapeDtypeStruct((R, M, E), jnp.float32),
        grid=(R, L),
        in_specs=in_specs,
        out_specs=pl.BlockSpec((1, M, E), xmap),
        compiler_params=pltpu.CompilerParams(
            dimension_semantics=("parallel", "arbitrary"),
            vmem_limit_bytes=VMEM_LIMIT),
    )(*args)


# ----------------------------- parameter preparation -----------------------------

def prepare_stack(blocks, num_heads):
    """Stack per-layer params with a leading L axis; pre-split heads; bf16 weights."""
    E = blocks[0]["qkv_w"].shape[0]
    H = num_heads
    Dh = E // H
    L = len(blocks)
    F = blocks[0]["fc1_w"].shape[1]

    def st(name):
        return jnp.stack([blk[name] for blk in blocks])

    qkv_w = st("qkv_w").reshape(L, E, 3, H, Dh)
    qkv_w = jnp.transpose(qkv_w, (0, 2, 3, 1, 4))       # (L, 3, H, E, Dh)
    qkv_b = st("qkv_b").reshape(L, 3, H, 1, Dh)

    bf = lambda a: a.astype(MATMUL_DTYPE)
    return dict(
        ln1_g=st("ln1_g").reshape(L, 1, E), ln1_b=st("ln1_b").reshape(L, 1, E),
        wq=bf(qkv_w[:, 0]), wk=bf(qkv_w[:, 1]), wv=bf(qkv_w[:, 2]),
        bq=qkv_b[:, 0], bk=qkv_b[:, 1], bv=qkv_b[:, 2],
        wo=bf(st("proj_w")), bo=st("proj_b").reshape(L, 1, E),
        ln2_g=st("ln2_g").reshape(L, 1, E), ln2_b=st("ln2_b").reshape(L, 1, E),
        w1=bf(st("fc1_w")), b1=st("fc1_b").reshape(L, 1, F),
        w2=bf(st("fc2_w")), b2=st("fc2_b").reshape(L, 1, E),
    )


def prepare_params(params, *, enc_heads, dec_heads):
    prepared = dict(params)
    prepared["embed_w"] = params["embed_w"].astype(MATMUL_DTYPE)
    prepared["final_w"] = params["final_w"].astype(MATMUL_DTYPE)
    prepared["enc_stack"] = prepare_stack(params["enc_blocks"], enc_heads)
    prepared["dec_stack"] = prepare_stack(params["dec_layers"], dec_heads)
    return prepared


# ----------------------------- model glue (plain JAX) -----------------------------

def sinusoidal_position_encoding(num_patches, embed_dim):
    # Matches the reference module exactly: sin at odd indices, cos at even indices.
    position = jnp.arange(num_patches, dtype=jnp.float32)[:, None]
    div_term = jnp.exp(jnp.arange(0, embed_dim, 2, dtype=jnp.float32)
                       * (-math.log(10000.0) / embed_dim))
    pe = jnp.zeros((num_patches, embed_dim), dtype=jnp.float32)
    pe = pe.at[:, 1::2].set(jnp.sin(position * div_term))
    pe = pe.at[:, 0::2].set(jnp.cos(position * div_term))
    return pe


def random_masking(x, num_masked, key):
    B, P, _ = x.shape
    noise = jax.random.uniform(key, (B, P))
    indices = jnp.argsort(noise, axis=1)             # random permutation per batch row
    visible_indices = indices[:, num_masked:]
    masked_indices = indices[:, :num_masked]
    visible_patches = jnp.take_along_axis(x, visible_indices[:, :, None], axis=1)
    return visible_patches, masked_indices, visible_indices


def _pick_patch_group(num_patches, attn_seq, max_rows=512):
    """Largest divisor of num_patches that keeps >=2 grid rows (megacore) and a
    modest activation block (<= max_rows matmul rows)."""
    best = 1
    for g in range(1, num_patches // 2 + 1):
        if num_patches % g == 0 and g * attn_seq <= max_rows:
            best = g
    return best


def mae_vit_forward(x, prepared, mask_key, *, embed_dim, num_masked, enc_heads, dec_heads):
    B, P, Din = x.shape
    E = embed_dim
    Sv = P - num_masked

    visible_patches, masked_indices, visible_indices = random_masking(x, num_masked, mask_key)
    pe = prepared["pos_enc"]                          # (P, E)
    visible_pos = pe[visible_indices]                 # (B, Sv, E)

    # Embed linear with the +pos-encoding add fused into its epilogue.
    h = linear(visible_patches.reshape(B * Sv, Din),
               prepared["embed_w"], prepared["embed_b"],
               add=visible_pos.reshape(B * Sv, E)).reshape(B, Sv, E)

    # Encoder: one fused pallas_call for all pre-norm ViT blocks + final LN.
    encoded = fused_transformer_stack(
        h, prepared["enc_stack"], seq=Sv, num_heads=enc_heads,
        pre_norm=True, activation="gelu", eps=1e-6,
        final_ln=(prepared["enc_norm_g"], prepared["enc_norm_b"]), final_eps=1e-6)
    # encoded: (B, Sv, E)

    # Full token tensor directly in (P, B, E) layout: the PyTorch decoder
    # (nn.TransformerEncoderLayer, batch_first=False) self-attends over the batch
    # axis, independently per patch.
    full_tokens = jnp.broadcast_to(prepared["mask_token"].reshape(1, 1, E), (P, B, E))
    full_tokens = full_tokens.at[visible_indices, jnp.arange(B)[:, None]].set(encoded)
    full_tokens = full_tokens + pe[:, None, :]

    # Decoder: block TP patches per grid step; one fused pallas_call for all layers.
    TP = _pick_patch_group(P, B)
    R = P // TP
    t = full_tokens.reshape(R, TP * B, E)
    t = fused_transformer_stack(
        t, prepared["dec_stack"], seq=B, num_heads=dec_heads,
        pre_norm=False, activation="relu", eps=1e-5)
    t = t.reshape(P, B, E)

    recon = linear(t.reshape(P * B, E),
                   prepared["final_w"], prepared["final_b"]).reshape(P, B, Din)
    recon = jnp.transpose(recon, (1, 0, 2))           # (B, P, Din)
    return recon, masked_indices


# ----------------------------- deterministic parameter init -----------------------------

def init_params(key, *, input_dim, embed_dim, num_patches, num_enc_blocks, num_dec_layers):
    E = embed_dim
    hidden = 4 * E
    keys = iter(jax.random.split(key, 512))

    def nrm(shape, std=0.02):
        return (std * jax.random.normal(next(keys), shape)).astype(jnp.float32)

    def transformer_block_params():
        return dict(
            ln1_g=jnp.ones((E,), jnp.float32), ln1_b=jnp.zeros((E,), jnp.float32),
            qkv_w=nrm((E, 3 * E)), qkv_b=jnp.zeros((3 * E,), jnp.float32),
            proj_w=nrm((E, E)), proj_b=jnp.zeros((E,), jnp.float32),
            ln2_g=jnp.ones((E,), jnp.float32), ln2_b=jnp.zeros((E,), jnp.float32),
            fc1_w=nrm((E, hidden)), fc1_b=jnp.zeros((hidden,), jnp.float32),
            fc2_w=nrm((hidden, E)), fc2_b=jnp.zeros((E,), jnp.float32),
        )

    return dict(
        embed_w=nrm((input_dim, E)), embed_b=jnp.zeros((E,), jnp.float32),
        enc_blocks=[transformer_block_params() for _ in range(num_enc_blocks)],
        enc_norm_g=jnp.ones((E,), jnp.float32), enc_norm_b=jnp.zeros((E,), jnp.float32),
        dec_layers=[transformer_block_params() for _ in range(num_dec_layers)],
        final_w=nrm((E, input_dim)), final_b=jnp.zeros((input_dim,), jnp.float32),
        mask_token=nrm((1, 1, E), std=1.0),
        pos_enc=sinusoidal_position_encoding(num_patches, E),
    )


# ----------------------------- main -----------------------------

if __name__ == "__main__":
    # Small, shape-consistent config (original: input_dim=256, embed_dim=192,
    # num_patches=196, 12 encoder blocks / 3 heads, 2 decoder layers / 6 heads).
    B = 2
    num_patches = 16
    input_dim = 32
    embed_dim = 64
    mask_ratio = 0.75
    num_masked = int(num_patches * mask_ratio)   # 12 masked -> 4 visible
    num_enc_blocks, enc_heads = 2, 4
    num_dec_layers, dec_heads = 2, 4

    root = jax.random.PRNGKey(0)
    k_param, k_data, k_mask = jax.random.split(root, 3)

    params = init_params(k_param, input_dim=input_dim, embed_dim=embed_dim,
                         num_patches=num_patches, num_enc_blocks=num_enc_blocks,
                         num_dec_layers=num_dec_layers)
    prepared = prepare_params(params, enc_heads=enc_heads, dec_heads=dec_heads)
    x = jax.random.normal(k_data, (B, num_patches, input_dim), dtype=jnp.float32)

    recon, masked_idx = mae_vit_forward(
        x, prepared, k_mask,
        embed_dim=embed_dim, num_masked=num_masked,
        enc_heads=enc_heads, dec_heads=dec_heads)

    jax.block_until_ready(recon)
    jax.block_until_ready(masked_idx)
    assert recon.shape == (B, num_patches, input_dim)
    assert masked_idx.shape == (B, num_masked)
    assert bool(jnp.all(jnp.isfinite(recon)))
    print("KERNEL_OK")
</pallas_src>

<mosaic_0001>
module attributes {stable_mosaic.version = 11 : i64} {
  func.func @_linear_kernel(%arg0: i32, %arg1: memref<8x32xf32, #tpu.memory_space<vmem>>, %arg2: memref<32x64xbf16, #tpu.memory_space<vmem>>, %arg3: memref<1x64xf32, #tpu.memory_space<vmem>>, %arg4: memref<8x64xf32, #tpu.memory_space<vmem>>, %arg5: memref<8x64xf32, #tpu.memory_space<vmem>>) attributes {dimension_semantics = [#tpu.dimension_semantics<parallel>], iteration_bounds = array<i64: 1>, scalar_prefetch = 0 : i64, scratch_operands = 0 : i64, tpu.core_type = #tpu.core_type<tc>, window_params = [{transform_indices = @transform_0, window_bounds = array<i64: 8, 32>}, {pipeline_mode = #tpu.pipeline_mode<synchronous>, transform_indices = @transform_1, window_bounds = array<i64: 32, 64>}, {pipeline_mode = #tpu.pipeline_mode<synchronous>, transform_indices = @transform_2, window_bounds = array<i64: 1, 64>}, {transform_indices = @transform_3, window_bounds = array<i64: 8, 64>}, {transform_indices = @transform_4, window_bounds = array<i64: 8, 64>}]} {
    %c0 = arith.constant 0 : index
    %c0_0 = arith.constant 0 : index
    %0 = vector.load %arg1[%c0, %c0_0] : memref<8x32xf32, #tpu.memory_space<vmem>>, vector<8x32xf32>
    %c0_1 = arith.constant 0 : index
    %c0_2 = arith.constant 0 : index
    %1 = vector.load %arg2[%c0_1, %c0_2] : memref<32x64xbf16, #tpu.memory_space<vmem>>, vector<32x64xbf16>
    %2 = arith.truncf %0 : vector<8x32xf32> to vector<8x32xbf16>
    %cst = arith.constant dense<0.000000e+00> : vector<8x64xf32>
    %3 = tpu.matmul %2, %1, %cst {dimension_numbers = #tpu.dot_dimension_numbers<[1], [0], [0], [1], [0, 0, 1, 1], [], []>} : vector<8x32xbf16>, vector<32x64xbf16>, vector<8x64xf32> -> vector<8x64xf32>
    %c0_3 = arith.constant 0 : index
    %c0_4 = arith.constant 0 : index
    %4 = vector.load %arg3[%c0_3, %c0_4] : memref<1x64xf32, #tpu.memory_space<vmem>>, vector<1x64xf32>
    %5 = vector.broadcast %4 : vector<1x64xf32> to vector<8x64xf32>
    %6 = arith.addf %3, %5 : vector<8x64xf32>
    %c0_5 = arith.constant 0 : index
    %c0_6 = arith.constant 0 : index
    %7 = vector.load %arg4[%c0_5, %c0_6] : memref<8x64xf32, #tpu.memory_space<vmem>>, vector<8x64xf32>
    %8 = arith.addf %6, %7 : vector<8x64xf32>
    %c0_7 = arith.constant 0 : index
    %c0_8 = arith.constant 0 : index
    %9 = vector.load %arg5[%c0_7, %c0_8] : memref<8x64xf32, #tpu.memory_space<vmem>>, vector<8x64xf32>
    tpu.vector_store %arg5[%c0_7, %c0_8], %8 {strides = array<i32>} : memref<8x64xf32, #tpu.memory_space<vmem>>, vector<8x64xf32>,
    return
  }
  func.func @transform_0(%arg0: i32) -> (i32, i32) {
    %c0_i32 = arith.constant 0 : i32
    %c0_i32_0 = arith.constant 0 : i32
    return %arg0, %c0_i32 : i32, i32
  }
  func.func @transform_1(%arg0: i32) -> (i32, i32) {
    %c0_i32 = arith.constant 0 : i32
    %c0_i32_0 = arith.constant 0 : i32
    %c0_i32_1 = arith.constant 0 : i32
    return %c0_i32, %c0_i32_0 : i32, i32
  }
  func.func @transform_2(%arg0: i32) -> (i32, i32) {
    %c0_i32 = arith.constant 0 : i32
    %c0_i32_0 = arith.constant 0 : i32
    %c0_i32_1 = arith.constant 0 : i32
    return %c0_i32, %c0_i32_0 : i32, i32
  }
  func.func @transform_3(%arg0: i32) -> (i32, i32) {
    %c0_i32 = arith.constant 0 : i32
    %c0_i32_0 = arith.constant 0 : i32
    return %arg0, %c0_i32 : i32, i32
  }
  func.func @transform_4(%arg0: i32) -> (i32, i32) {
    %c0_i32 = arith.constant 0 : i32
    %c0_i32_0 = arith.constant 0 : i32
    return %arg0, %c0_i32 : i32, i32
  }
}

</mosaic_0001>

<llo_original>
// kernel: tpu_custom_call.1
$region0: #{tpu_custom_call.1}
  #allocation0 [shape = 'u32[]', space=smem, size = 0x4, offset = 0x4, fixed_abs, tag = 'smem constant byte address 0x4 - core index']
  #allocation1 [shape = 'u32[144,128]{1,0:T(1,128)}', space=vmem, size = 0x12000, scoped, tag = 'internal scratch']
  %s0 = inlined_call_operand.hbm [shape: f32[8,32], index: 0, kind: input, shape index: {}]
  %s1 = inlined_call_operand.hbm [shape: bf16[32,64], index: 1, kind: input, shape index: {}]
  %s2 = inlined_call_operand.vmem [shape: f32[1,64], index: 2, kind: input, shape index: {}]
  %s3 = inlined_call_operand.vmem [shape: f32[8,64], index: 3, kind: input, shape index: {}]
  %s4 = inlined_call_operand.hbm [shape: f32[8,64], index: 4, kind: output, shape index: {}]
  %s5 = sld [smem:[#allocation0]]
  $region34: #{tpu_custom_call.1} parent=0
    _
  %s7 = ssub.s32 1, %s5
  %s8 = scalar_select 0, %s7, %s5
  $region1: #{tpu_custom_call.1} parent=0
    #allocation2 [shape = 'u8[4096]{0}', space=vmem, size = 0x1000, scoped, tag = 'input window, operand 0, single buffered']
    #allocation3 [shape = 's32[1]{0}', space=sflag, size = 0x4, scoped, tag = 'scoped memory for tpu_custom_call.1']
    #allocation4 [shape = 's32[1]{0}', space=sflag, size = 0x4, scoped, tag = 'scoped memory for tpu_custom_call.1']
    #allocation5 [shape = 'u8[8192]{0}', space=vmem, size = 0x2000, scoped, tag = 'input window, operand 1, single buffered']
    #allocation6 [shape = 's32[1]{0}', space=sflag, size = 0x4, scoped, tag = 'scoped memory for tpu_custom_call.1']
    #allocation7 [shape = 'u8[4096]{0}', space=vmem, size = 0x1000, scoped, tag = 'output window, operand 0, single buffered']
    %9 = vsyncpa [#allocation3], 0
    %10 = vsyncpa [#allocation6], 0
    %11 = vsyncpa [#allocation4], 0
    // Predicated region
    $region2: #{tpu_custom_call.1} parent=1 // pred_check
      _
    $region3: #{tpu_custom_call.1} parent=1 // pred_check_branch
      %13 = sbr.rel (0) target = $region5
    $region4: #{tpu_custom_call.1} parent=1 // pred_region
      %s15 = ssub.s32 128, 128
      %16 = vsyncadd [#allocation3], %s15
      %s18 = sshll.u32 [#allocation2], 4
      %s19 = int_to_ptr.vmem [resolvable:$true] %s18
      %21 = dma.hbm_to_vmem [thread:$0]  %s0, 128, %s19, [#allocation3]
    $region5: #{tpu_custom_call.1} parent=1 // pred_fallthru
      _
    // Predicated region
    $region6: #{tpu_custom_call.1} parent=1 // pred_check
      _
    $region7: #{tpu_custom_call.1} parent=1 // pred_check_branch
      %23 = sbr.rel (0) target = $region9
    $region8: #{tpu_custom_call.1} parent=1 // pred_region
      %s25 = ssub.s32 256, 256
      %26 = vsyncadd [#allocation6], %s25
      %s27 = sshll.u32 [#allocation5], 4
      %s28 = int_to_ptr.vmem [resolvable:$true] %s27
      %33 = dma.hbm_to_vmem [thread:$0]  %s1, 256, %s28, [#allocation6], 64, 64, 4
    $region9: #{tpu_custom_call.1} parent=1 // pred_fallthru
      _
    // Predicated region
    $region10: #{tpu_custom_call.1} parent=1 // pred_check
      _
    $region11: #{tpu_custom_call.1} parent=1 // pred_check_branch
      %35 = sbr.rel (0) target = $region13
    $region12: #{tpu_custom_call.1} parent=1 // pred_region
      _
    $region13: #{tpu_custom_call.1} parent=1 // pred_fallthru
      _
    // Predicated region
    $region14: #{tpu_custom_call.1} parent=1 // pred_check
      _
    $region15: #{tpu_custom_call.1} parent=1 // pred_check_branch
      %37 = sbr.rel (0) target = $region17
    $region16: #{tpu_custom_call.1} parent=1 // pred_region
      _
    $region17: #{tpu_custom_call.1} parent=1 // pred_fallthru
      _
    // Predicated region
    $region18: #{tpu_custom_call.1} parent=1 // pred_check
      _
    $region19: #{tpu_custom_call.1} parent=1 // pred_check_branch
      %39 = sbr.rel (0) target = $region21
    $region20: #{tpu_custom_call.1} parent=1 // pred_region
      %40 = dma.done [#allocation3], 128
    $region21: #{tpu_custom_call.1} parent=1 // pred_fallthru
      _
    // Predicated region
    $region22: #{tpu_custom_call.1} parent=1 // pred_check
      _
    $region23: #{tpu_custom_call.1} parent=1 // pred_check_branch
      %42 = sbr.rel (0) target = $region25
    $region24: #{tpu_custom_call.1} parent=1 // pred_region
      %43 = dma.done [#allocation6], 256
    $region25: #{tpu_custom_call.1} parent=1 // pred_fallthru
      _
    %v45 = vld [vmem:[#allocation2] sm:$0xff]
    %v46 = vld [vmem:[#allocation5] sm:$0xf]
    %v47 = vld [vmem:[#allocation5 + $0x4] sm:$0xf]
    %v48 = vld [vmem:[#allocation5 + $0x8] sm:$0xf]
    %v49 = vld [vmem:[#allocation5 + $0xc] sm:$0xf]
    %v50 = vpack.c.bf16 %v45, %v45
    %v51 = vld [vmem:[%s2] sm:$0x1]
    %v53 = vlaneseq
    %v54 = vshrl.u32 %v53, 7
    %v55 = vsub.s32 0, %v54
    %v56 = vrot.slane %v51, %v55
    %v62 = vunpack.c.l.b16 %v46
    %v63 = vunpack.c.l.b16 %v47
    %v64 = vunpack.c.l.b16 %v48
    %v65 = vunpack.c.l.b16 %v49
    %v66 = vpack.c.b16 %v63, %v62
    %v67 = vpack.c.b16 %v65, %v64
    %vm70 = vcmask 261120
    %v72 = vsel %vm70, %v50, 0
    %74 = vmatprep.subr.bf16.mxu0 0
    %75 = vmatpush1.bf16.msra.mxu0 %v66
    %76 = vmatprep.subr.bf16.mxu0 0
    %77 = vmatpush1.bf16.msra.mxu0 %v67
    %78 = vmatprep.subr.bf16.mxu0 0
    %79 = vmatpush1.bf16.msra.mxu0 0
    %80 = vmatprep.subr.bf16.mxu0 0
    %81 = vmatpush1.bf16.msra.mxu0 0
    %82 = vmatprep.subr.bf16.mxu0 0
    %83 = vmatpush1.bf16.msra.mxu0 0
    %84 = vmatprep.subr.bf16.mxu0 0
    %85 = vmatpush1.bf16.msra.mxu0 0
    %86 = vmatprep.subr.bf16.mxu0 0
    %87 = vmatpush1.bf16.msra.mxu0 0
    %88 = vmatprep.subr.bf16.mxu0 0
    %89 = vmatpush1.bf16.msra.mxu0 0
    %90 = vmatprep.subr.bf16.mxu0 0
    %91 = vmatpush1.bf16.msra.mxu0 0
    %92 = vmatprep.subr.bf16.mxu0 0
    %93 = vmatpush1.bf16.msra.mxu0 0
    %94 = vmatprep.subr.bf16.mxu0 0
    %95 = vmatpush1.bf16.msra.mxu0 0
    %96 = vmatprep.subr.bf16.mxu0 0
    %97 = vmatpush1.bf16.msra.mxu0 0
    %98 = vmatprep.subr.bf16.mxu0 0
    %99 = vmatpush1.bf16.msra.mxu0 0
    %100 = vmatprep.subr.bf16.mxu0 0
    %101 = vmatpush1.bf16.msra.mxu0 0
    %102 = vmatprep.subr.bf16.mxu0 0
    %103 = vmatpush1.bf16.msra.mxu0 0
    %104 = vmatprep.subr.bf16.mxu0 0
    %105 = vmatpush1.bf16.msra.mxu0 0
    %106 = vmatprep.mubr.bf16.mxu0 0
    %107 = vmatmul.mubr.bf16.gmra.mrb[0].mxu0 %v72
    %v108 = vpop.f32.mrb[0].mxu0
    %v109 = vadd.f32 %v56, %v108
    %v110 = vpop.f32.mrb[0].mxu0
    %v111 = vpop.f32.mrb[0].mxu0
    %v112 = vpop.f32.mrb[0].mxu0
    %113 = vdwg.mxu0
    %v114 = vld [vmem:[%s3] sm:$0xff]
    %v115 = vadd.f32 %v109, %v114
    %vm116 = vcmask 523264
    %117 = vst.msk [vmem:[#allocation7] sm:$0xff] %vm116, %v115
    // Predicated region
    $region26: #{tpu_custom_call.1} parent=1 // pred_check
      _
    $region27: #{tpu_custom_call.1} parent=1 // pred_check_branch
      %119 = sbr.rel (0) target = $region29
    $region28: #{tpu_custom_call.1} parent=1 // pred_region
      %s121 = ssub.s32 128, 128
      %122 = vsyncadd [#allocation4], %s121
      %s124 = sshll.u32 [#allocation7], 4
      %s125 = int_to_ptr.vmem [resolvable:$true] %s124
      %127 = dma.vmem_to_hbm [thread:$0]  %s125, 128, %s4, [#allocation4]
    $region29: #{tpu_custom_call.1} parent=1 // pred_fallthru
      _
    // Predicated region
    $region30: #{tpu_custom_call.1} parent=1 // pred_check
      _
    $region31: #{tpu_custom_call.1} parent=1 // pred_check_branch
      %129 = sbr.rel (0) target = $region33
    $region32: #{tpu_custom_call.1} parent=1 // pred_region
      %130 = dma.done [#allocation4], 128
    $region33: #{tpu_custom_call.1} parent=1 // pred_fallthru
      _
    %131 = vsyncpa [#allocation3], 1
    %132 = vsyncpa [#allocation6], 1
    %133 = vsyncpa [#allocation4], 1

</llo_original>
